<compile_context>
chip_gen: v7x
topology: tpu7x:2x2x1
jax: 0.10.0
libtpu: 0.0.40
codegen_flags: <defaults>
</compile_context>

<pallas_src>
import functools

import jax
import jax.numpy as jnp
from jax import lax
from jax.experimental import pallas as pl
from jax.experimental.pallas import tpu as pltpu


# ----------------------------------------------------------------------------
# Generation-aware VMEM budget and tile sizing.
# ----------------------------------------------------------------------------
def _cdiv(a, b):
    return -(-a // b)


@functools.lru_cache(maxsize=1)
def _vmem_limit_bytes():
    """Scoped-VMEM limit: ~75% of physical per-core VMEM (48 MiB v7x, 96 MiB v5e/v6e)."""
    phys = 64 * 1024 * 1024  # conservative default (v7x per-core VMEM)
    try:
        info = pltpu.get_tpu_info()
        cap = getattr(info, "vmem_capacity_bytes", None)
        if cap:
            phys = int(cap)
    except Exception:  # fall back conservatively if the query is unavailable
        pass
    return (3 * phys) // 4


def _s_tile_target_bytes():
    # Apply kernel holds ~4 live streamed-tile buffers (+ W); limit/12 leaves
    # ample headroom: ~8 MiB tiles on v5e/v6e, ~4 MiB on v7x.
    return max(2 * 1024 * 1024, _vmem_limit_bytes() // 12)


def _resolve_s_tile(S, cb, itemsize, s_tile):
    """Lane-axis tile: multiple of 128 (tail masked) or the full S if it fits."""
    if s_tile is not None:
        if s_tile >= S:
            return S
        assert s_tile % 128 == 0, "s_tile must be a multiple of 128 (or >= S)"
        return s_tile
    target = _s_tile_target_bytes()
    max_ts = max(128, (target // max(1, itemsize * cb)) // 128 * 128)
    return S if S <= max_ts else max_ts


def _choose_channel_block(g, d, max_cb=256):
    """Largest k | g with k*d <= max_cb: batch k groups into one (cb, ts) block."""
    k_cap = max(1, min(g, max_cb // max(1, d)))
    for k in range(k_cap, 0, -1):
        if g % k == 0:
            return k
    return 1


def _choose_chunks(N, s_tiles):
    """Second 'parallel' axis for the moments reduction (keeps both v7x TCs busy)."""
    if N % 2 == 0:
        return 2, False          # chunk along batch
    if s_tiles % 2 == 0:
        return 2, True           # chunk along spatial tiles
    return 1, False


# ----------------------------------------------------------------------------
# Phase A: streaming raw moments (per-chunk partial sum and Gram matrix).
# ----------------------------------------------------------------------------
def _moments_kernel(x_ref, sum_ref, gram_ref, *, ts, S, s_per_chunk,
                    chunk_spatial, ragged):
    c = pl.program_id(0)
    nj = pl.program_id(2)
    si = pl.program_id(3)

    @pl.when((nj == 0) & (si == 0))
    def _init():
        sum_ref[...] = jnp.zeros(sum_ref.shape, jnp.float32)
        gram_ref[...] = jnp.zeros(gram_ref.shape, jnp.float32)

    x = x_ref[0, 0]                                          # (cb, ts) native dtype
    if ragged:                                               # mask padded tail cols
        si_glob = c * s_per_chunk + si if chunk_spatial else si
        valid = S - si_glob * ts
        col = lax.broadcasted_iota(jnp.int32, x.shape, 1)
        x = jnp.where(col < valid, x, jnp.zeros_like(x))
    # per-channel sums (VPU/XLU) in f32; Gram (MXU) with native operands, f32 acc
    sum_ref[0, 0] += jnp.sum(x.astype(jnp.float32), axis=-1, keepdims=True)
    gram_ref[0, 0] += lax.dot_general(
        x, x, (((1,), (1,)), ((), ())), preferred_element_type=jnp.float32)


def _pallas_moments(x_view, *, ts):
    """x_view: (N, B, cb, S).  Returns (sum (B,cb,1), gram (B,cb,cb)) in f32."""
    N, B, cb, S = x_view.shape
    s_tiles = _cdiv(S, ts)
    ragged = (S % ts) != 0
    n_chunks, chunk_spatial = _choose_chunks(N, s_tiles)
    if chunk_spatial:
        n_axis, s_axis = N, s_tiles // n_chunks
        x_map = lambda c, b, nj, si: (nj, b, 0, c * s_axis + si)
    else:
        n_axis, s_axis = N // n_chunks, s_tiles
        x_map = lambda c, b, nj, si: (c * n_axis + nj, b, 0, si)

    kernel = functools.partial(_moments_kernel, ts=ts, S=S, s_per_chunk=s_axis,
                               chunk_spatial=chunk_spatial, ragged=ragged)
    sum_p, gram_p = pl.pallas_call(
        kernel,
        out_shape=(jax.ShapeDtypeStruct((n_chunks, B, cb, 1), jnp.float32),
                   jax.ShapeDtypeStruct((n_chunks, B, cb, cb), jnp.float32)),
        grid_spec=pltpu.PrefetchScalarGridSpec(
            num_scalar_prefetch=0,
            grid=(n_chunks, B, n_axis, s_axis),
            in_specs=[pl.BlockSpec((1, 1, cb, ts), x_map)],
            out_specs=(
                pl.BlockSpec((1, 1, cb, 1), lambda c, b, nj, si: (c, b, 0, 0)),
                pl.BlockSpec((1, 1, cb, cb), lambda c, b, nj, si: (c, b, 0, 0)))),
        compiler_params=pltpu.CompilerParams(
            dimension_semantics=("parallel", "parallel", "arbitrary", "arbitrary"),
            vmem_limit_bytes=_vmem_limit_bytes()),
    )(x_view)
    # tiny cross-chunk combine in XLA
    return sum_p.sum(axis=0), gram_p.sum(axis=0)


# ----------------------------------------------------------------------------
# XLA glue: Newton-Schulz whitening (batched over groups) + affine folding.
# ----------------------------------------------------------------------------
def _whitening_from_moments(sum_cb, gram_cb, *, g, d, k, m_total, T, eps):
    hp = lax.Precision.HIGHEST
    B = g // k
    mean = (sum_cb / m_total).reshape(g, d, 1)
    eye_k = jnp.eye(k, dtype=jnp.float32)
    gram_g = jnp.einsum('bkdle,kl->bkde',
                        gram_cb.reshape(B, k, d, k, d), eye_k).reshape(g, d, d)
    eye_d = jnp.eye(d, dtype=jnp.float32)
    # NOTE: single-pass (uncentered) covariance; validated vs the centered
    # reference at f32 on these tests.
    sigma = (eps * eye_d + gram_g / m_total
             - jnp.matmul(mean, jnp.transpose(mean, (0, 2, 1)), precision=hp))
    trace = jnp.trace(sigma, axis1=1, axis2=2)[:, None, None]
    r_tr = 1.0 / trace
    sigma_n = sigma * r_tr
    p = jnp.broadcast_to(eye_d, (g, d, d))
    for _ in range(T):  # Newton-Schulz, batched over groups (outside the kernel)
        p2 = jnp.matmul(p, p, precision=hp)
        p3 = jnp.matmul(p2, p, precision=hp)
        p = 1.5 * p - 0.5 * jnp.matmul(p3, sigma_n, precision=hp)
    wm = p * jnp.sqrt(r_tr)
    return mean, wm


def _fold_affine(wm, mean, w_g, b_g, *, g, d, k):
    """W_eff = diag(weight) @ wm (block-diagonal per channel block), b_eff folded."""
    hp = lax.Precision.HIGHEST
    B, cb = g // k, k * d
    w_eff = w_g * wm                                        # (g, d, d)
    b_eff = b_g - jnp.matmul(w_eff, mean, precision=hp)     # (g, d, 1)
    eye_k = jnp.eye(k, dtype=jnp.float32)
    w_blk = jnp.einsum('bkde,kl->bkdle',
                       w_eff.reshape(B, k, d, d), eye_k).reshape(B, cb, cb)
    return w_blk, b_eff.reshape(B, cb, 1)


# ----------------------------------------------------------------------------
# Phase B: streaming whitening + fused affine:  out = W_blk @ x + b_blk.
# ----------------------------------------------------------------------------
def _apply_kernel(x_ref, w_ref, b_ref, o_ref):
    y = jnp.dot(w_ref[0], x_ref[0, 0], preferred_element_type=jnp.float32)
    o_ref[0, 0] = (y + b_ref[0]).astype(o_ref.dtype)


def _pallas_apply(x_view, w_blk, b_blk, *, ts):
    """x_view: (N, B, cb, S); w_blk: (B, cb, cb) in x dtype; b_blk: (B, cb, 1) f32."""
    N, B, cb, S = x_view.shape
    s_tiles = _cdiv(S, ts)
    return pl.pallas_call(
        _apply_kernel,
        out_shape=jax.ShapeDtypeStruct((N, B, cb, S), x_view.dtype),
        grid_spec=pltpu.PrefetchScalarGridSpec(
            num_scalar_prefetch=0,
            grid=(B, N, s_tiles),
            in_specs=[
                pl.BlockSpec((1, 1, cb, ts), lambda b, nj, si: (nj, b, 0, si)),
                pl.BlockSpec((1, cb, cb), lambda b, nj, si: (b, 0, 0)),
                pl.BlockSpec((1, cb, 1), lambda b, nj, si: (b, 0, 0)),
            ],
            out_specs=pl.BlockSpec((1, 1, cb, ts),
                                   lambda b, nj, si: (nj, b, 0, si))),
        compiler_params=pltpu.CompilerParams(
            dimension_semantics=("parallel", "parallel", "parallel"),
            vmem_limit_bytes=_vmem_limit_bytes()),
    )(x_view, w_blk, b_blk)


# ----------------------------------------------------------------------------
# Jitted functional glue (free reshapes + tiny per-group folding math).
# ----------------------------------------------------------------------------
def _flat_spatial(X):
    S = 1
    for s in X.shape[2:]:
        S *= s
    return S


@functools.partial(jax.jit, static_argnames=("g", "d", "T", "eps", "s_tile"))
def _iternorm_train(X, w_g, b_g, *, g, d, T, eps, s_tile):
    N = X.shape[0]
    S = _flat_spatial(X)
    k = _choose_channel_block(g, d)
    B, cb = g // k, k * d
    ts = _resolve_s_tile(S, cb, X.dtype.itemsize, s_tile)
    x_view = X.reshape(N, B, cb, S)                          # free view reshape
    sum_cb, gram_cb = _pallas_moments(x_view, ts=ts)
    mean, wm = _whitening_from_moments(sum_cb, gram_cb, g=g, d=d, k=k,
                                       m_total=N * S, T=T, eps=eps)
    w_blk, b_blk = _fold_affine(wm, mean, w_g, b_g, g=g, d=d, k=k)
    out_view = _pallas_apply(x_view, w_blk.astype(X.dtype), b_blk, ts=ts)
    return out_view.reshape(X.shape), mean, wm


@functools.partial(jax.jit, static_argnames=("g", "d", "s_tile"))
def _iternorm_eval(X, w_g, b_g, running_mean, running_wm, *, g, d, s_tile):
    N = X.shape[0]
    S = _flat_spatial(X)
    k = _choose_channel_block(g, d)
    B, cb = g // k, k * d
    ts = _resolve_s_tile(S, cb, X.dtype.itemsize, s_tile)
    x_view = X.reshape(N, B, cb, S)
    w_blk, b_blk = _fold_affine(running_wm, running_mean, w_g, b_g, g=g, d=d, k=k)
    out_view = _pallas_apply(x_view, w_blk.astype(X.dtype), b_blk, ts=ts)
    return out_view.reshape(X.shape)


# ----------------------------------------------------------------------------
# Module-equivalent wrapper (deterministic init; forward semantics of IterNorm).
# ----------------------------------------------------------------------------
class IterNormPallas:
    def __init__(self, num_features, num_groups=1, num_channels=None, T=5,
                 dim=4, eps=1e-5, momentum=0.1, affine=True, s_tile=None):
        self.T = T
        self.eps = eps
        self.momentum = momentum
        self.num_features = num_features
        self.affine = affine
        self.dim = dim
        self.s_tile = s_tile
        if num_channels is None:
            num_channels = (num_features - 1) // num_groups + 1
        num_groups = num_features // num_channels
        while num_features % num_channels != 0:
            num_channels //= 2
            if num_channels == 0:
                raise ValueError(
                    "no valid channel grouping for num_features=%d" % num_features)
            num_groups = num_features // num_channels
        assert num_groups > 0 and num_features % num_groups == 0
        self.num_groups = num_groups
        self.num_channels = num_channels

        shape = [1] * dim
        shape[1] = num_features
        if affine:
            # torch.nn.init.ones_ / zeros_  -> deterministic
            self.weight = jnp.ones(shape, jnp.float32)
            self.bias = jnp.zeros(shape, jnp.float32)
        else:
            self.weight = None
            self.bias = None

        self.running_mean = jnp.zeros((num_groups, num_channels, 1), jnp.float32)
        self.running_wm = jnp.broadcast_to(
            jnp.eye(num_channels, dtype=jnp.float32),
            (num_groups, num_channels, num_channels))

    def __call__(self, X, training=True):
        g, d = self.num_groups, self.num_channels
        if self.affine:
            w_g = self.weight.reshape(g, d, 1)
            b_g = self.bias.reshape(g, d, 1)
        else:
            w_g = jnp.ones((g, d, 1), jnp.float32)
            b_g = jnp.zeros((g, d, 1), jnp.float32)

        if training:
            out, mean, wm = _iternorm_train(
                X, w_g, b_g, g=g, d=d, T=self.T, eps=self.eps, s_tile=self.s_tile)
            # running-buffer update (side effect of forward in the torch module)
            self.running_mean = (self.momentum * mean
                                 + (1.0 - self.momentum) * self.running_mean)
            self.running_wm = (self.momentum * wm
                               + (1.0 - self.momentum) * self.running_wm)
            return out
        return _iternorm_eval(X, w_g, b_g, self.running_mean, self.running_wm,
                              g=g, d=d, s_tile=self.s_tile)


# ----------------------------------------------------------------------------
# Pure-JAX references (mirror the PyTorch math) for numerical verification.
# ----------------------------------------------------------------------------
def _reference_train(X, nc, T, eps, weight, bias):
    hp = lax.Precision.HIGHEST
    N, C = X.shape[0], X.shape[1]
    g = C // nc
    perm = (1, 0) + tuple(range(2, X.ndim))
    x = jnp.transpose(X, perm).reshape(g, nc, -1)
    m = x.shape[-1]
    mean = x.mean(-1, keepdims=True)
    xc = x - mean
    eye = jnp.eye(nc, dtype=jnp.float32)[None]
    Sigma = eps * eye + jnp.einsum('gdm,gem->gde', xc, xc, precision=hp) / m
    rTr = 1.0 / jnp.trace(Sigma, axis1=1, axis2=2)[:, None, None]
    Sigma_N = Sigma * rTr
    P = jnp.broadcast_to(jnp.eye(nc, dtype=jnp.float32), (g, nc, nc))
    for _ in range(T):
        P2 = jnp.matmul(P, P, precision=hp)
        P3 = jnp.matmul(P2, P, precision=hp)
        P = 1.5 * P - 0.5 * jnp.matmul(P3, Sigma_N, precision=hp)
    wm = P * jnp.sqrt(rTr)
    xn = jnp.matmul(wm, xc, precision=hp)
    Xn = jnp.transpose(xn.reshape((C, N) + X.shape[2:]), perm)
    out = Xn * weight + bias if weight is not None else Xn
    return out, mean, wm


def _reference_eval(X, nc, running_mean, running_wm, weight, bias):
    hp = lax.Precision.HIGHEST
    N, C = X.shape[0], X.shape[1]
    g = C // nc
    perm = (1, 0) + tuple(range(2, X.ndim))
    x = jnp.transpose(X, perm).reshape(g, nc, -1)
    xn = jnp.matmul(running_wm, x - running_mean, precision=hp)
    Xn = jnp.transpose(xn.reshape((C, N) + X.shape[2:]), perm)
    return Xn * weight + bias if weight is not None else Xn


if __name__ == "__main__":
    key = jax.random.PRNGKey(0)
    k1, k2 = jax.random.split(key)

    # ---- test 1: C=16, 2 groups (d=8 -> batched into one cb=16 block), S=256,
    #              forced s_tile=128 so the moments reduction spans several tiles.
    N, C, H, W = 2, 16, 16, 16
    X = jax.random.normal(k1, (N, C, H, W), dtype=jnp.float32)
    mod = IterNormPallas(num_features=C, num_groups=2, T=5, dim=4,
                         eps=1e-5, momentum=0.1, affine=True, s_tile=128)

    out = jax.block_until_ready(mod(X, training=True))
    assert out.shape == X.shape and out.dtype == X.dtype

    ref_out, ref_mean, ref_wm = _reference_train(
        X, mod.num_channels, mod.T, mod.eps, mod.weight, mod.bias)
    ref_out = jax.block_until_ready(ref_out)
    err = float(jnp.max(jnp.abs(out - ref_out)))
    assert jnp.allclose(out, ref_out, atol=5e-4, rtol=5e-4), err

    d = mod.num_channels
    exp_rm = mod.momentum * ref_mean
    exp_rwm = (mod.momentum * ref_wm
               + (1.0 - mod.momentum) * jnp.eye(d, dtype=jnp.float32)[None])
    assert jnp.allclose(mod.running_mean, exp_rm, atol=1e-3, rtol=1e-3)
    assert jnp.allclose(mod.running_wm, exp_rwm, atol=1e-3, rtol=1e-3)

    # eval forward (uses running buffers through the same apply kernel)
    out_eval = jax.block_until_ready(mod(X, training=False))
    ref_eval = _reference_eval(X, mod.num_channels, mod.running_mean,
                               mod.running_wm, mod.weight, mod.bias)
    err_eval = float(jnp.max(jnp.abs(out_eval - ref_eval)))
    assert jnp.allclose(out_eval, ref_eval, atol=5e-4, rtol=5e-4), err_eval

    # ---- test 2: ragged spatial axis (S=320, not a multiple of the 128 tile):
    #              exercises in-kernel tail masking + clipped output blocks.
    N2, C2, H2, W2 = 2, 8, 16, 20
    X2 = jax.random.normal(k2, (N2, C2, H2, W2), dtype=jnp.float32)
    mod2 = IterNormPallas(num_features=C2, num_groups=1, T=5, dim=4,
                          eps=1e-5, momentum=0.1, affine=True, s_tile=128)
    out2 = jax.block_until_ready(mod2(X2, training=True))
    ref2, _, _ = _reference_train(X2, mod2.num_channels, mod2.T, mod2.eps,
                                  mod2.weight, mod2.bias)
    err2 = float(jnp.max(jnp.abs(out2 - ref2)))
    assert jnp.allclose(out2, ref2, atol=5e-4, rtol=5e-4), err2

    print("KERNEL_OK")
</pallas_src>

<mosaic_0001>
module attributes {stable_mosaic.version = 11 : i64} {
  func.func @_moments_kernel(%arg0: i32, %arg1: i32, %arg2: i32, %arg3: i32, %arg4: memref<1x1x16x128xf32, #tpu.memory_space<vmem>>, %arg5: memref<1x1x16x1xf32, #tpu.memory_space<vmem>>, %arg6: memref<1x1x16x16xf32, #tpu.memory_space<vmem>>) attributes {dimension_semantics = [#tpu.dimension_semantics<parallel>, #tpu.dimension_semantics<parallel>, #tpu.dimension_semantics<arbitrary>, #tpu.dimension_semantics<arbitrary>], iteration_bounds = array<i64: 2, 1, 1, 2>, scalar_prefetch = 0 : i64, scratch_operands = 0 : i64, tpu.core_type = #tpu.core_type<tc>, window_params = [{transform_indices = @transform_0, window_bounds = array<i64: 1, 1, 16, 128>}, {transform_indices = @transform_1, window_bounds = array<i64: 1, 1, 16, 1>}, {transform_indices = @transform_2, window_bounds = array<i64: 1, 1, 16, 16>}]} {
    %c0_i32 = arith.constant 0 : i32
    %0 = arith.cmpi eq, %arg2, %c0_i32 : i32
    %c0_i32_0 = arith.constant 0 : i32
    %1 = arith.cmpi eq, %arg3, %c0_i32_0 : i32
    %2 = arith.andi %0, %1 : i1
    %3 = arith.extui %2 : i1 to i32
    %c0_i32_1 = arith.constant 0 : i32
    %4 = arith.cmpi ne, %3, %c0_i32_1 : i32
    scf.if %4 {
      %cst_22 = arith.constant 0.000000e+00 : f32
      %22 = vector.broadcast %cst_22 : f32 to vector<1x1x16x1xf32>
      %c0_23 = arith.constant 0 : index
      %c0_24 = arith.constant 0 : index
      %c0_25 = arith.constant 0 : index
      %c0_26 = arith.constant 0 : index
      %23 = vector.load %arg5[%c0_23, %c0_24, %c0_25, %c0_26] : memref<1x1x16x1xf32, #tpu.memory_space<vmem>>, vector<1x1x16x1xf32>
      tpu.vector_store %arg5[%c0_23, %c0_24, %c0_25, %c0_26], %22 {strides = array<i32>} : memref<1x1x16x1xf32, #tpu.memory_space<vmem>>, vector<1x1x16x1xf32>,
      %cst_27 = arith.constant 0.000000e+00 : f32
      %24 = vector.broadcast %cst_27 : f32 to vector<1x1x16x16xf32>
      %c0_28 = arith.constant 0 : index
      %c0_29 = arith.constant 0 : index
      %c0_30 = arith.constant 0 : index
      %c0_31 = arith.constant 0 : index
      %25 = vector.load %arg6[%c0_28, %c0_29, %c0_30, %c0_31] : memref<1x1x16x16xf32, #tpu.memory_space<vmem>>, vector<1x1x16x16xf32>
      tpu.vector_store %arg6[%c0_28, %c0_29, %c0_30, %c0_31], %24 {strides = array<i32>} : memref<1x1x16x16xf32, #tpu.memory_space<vmem>>, vector<1x1x16x16xf32>,
    } else {
    }
    %c0 = arith.constant 0 : index
    %c0_2 = arith.constant 0 : index
    %c0_3 = arith.constant 0 : index
    %c0_4 = arith.constant 0 : index
    %5 = vector.load %arg4[%c0, %c0_2, %c0_3, %c0_4] : memref<1x1x16x128xf32, #tpu.memory_space<vmem>>, vector<1x1x16x128xf32>
    %6 = vector.shape_cast %5 : vector<1x1x16x128xf32> to vector<16x128xf32>
    %c0_5 = arith.constant 0 : index
    %c0_6 = arith.constant 0 : index
    %c0_7 = arith.constant 0 : index
    %c0_8 = arith.constant 0 : index
    %7 = vector.load %arg5[%c0_5, %c0_6, %c0_7, %c0_8] : memref<1x1x16x1xf32, #tpu.memory_space<vmem>>, vector<1x1x16x1xf32>
    %8 = vector.shape_cast %7 : vector<1x1x16x1xf32> to vector<16x1xf32>
    %cst = arith.constant dense<0.000000e+00> : vector<16xf32>
    %9 = vector.multi_reduction <add>, %6, %cst [1] : vector<16x128xf32> to vector<16xf32>
    %10 = vector.shape_cast %9 : vector<16xf32> to vector<16x1xf32>
    %11 = arith.addf %8, %10 : vector<16x1xf32>
    %c0_9 = arith.constant 0 : index
    %c0_10 = arith.constant 0 : index
    %c0_11 = arith.constant 0 : index
    %c0_12 = arith.constant 0 : index
    %12 = vector.load %arg5[%c0_9, %c0_10, %c0_11, %c0_12] : memref<1x1x16x1xf32, #tpu.memory_space<vmem>>, vector<1x1x16x1xf32>
    %13 = vector.shape_cast %12 : vector<1x1x16x1xf32> to vector<16x1xf32>
    %14 = vector.shape_cast %11 : vector<16x1xf32> to vector<1x1x16x1xf32>
    tpu.vector_store %arg5[%c0_9, %c0_10, %c0_11, %c0_12], %14 {strides = array<i32>} : memref<1x1x16x1xf32, #tpu.memory_space<vmem>>, vector<1x1x16x1xf32>,
    %c0_13 = arith.constant 0 : index
    %c0_14 = arith.constant 0 : index
    %c0_15 = arith.constant 0 : index
    %c0_16 = arith.constant 0 : index
    %15 = vector.load %arg6[%c0_13, %c0_14, %c0_15, %c0_16] : memref<1x1x16x16xf32, #tpu.memory_space<vmem>>, vector<1x1x16x16xf32>
    %16 = vector.shape_cast %15 : vector<1x1x16x16xf32> to vector<16x16xf32>
    %cst_17 = arith.constant dense<0.000000e+00> : vector<16x16xf32>
    %17 = tpu.matmul %6, %6, %cst_17 {dimension_numbers = #tpu.dot_dimension_numbers<[1], [1], [0], [0], [0, 0, 1, 0], [], []>} : vector<16x128xf32>, vector<16x128xf32>, vector<16x16xf32> -> vector<16x16xf32>
    %18 = arith.addf %16, %17 : vector<16x16xf32>
    %c0_18 = arith.constant 0 : index
    %c0_19 = arith.constant 0 : index
    %c0_20 = arith.constant 0 : index
    %c0_21 = arith.constant 0 : index
    %19 = vector.load %arg6[%c0_18, %c0_19, %c0_20, %c0_21] : memref<1x1x16x16xf32, #tpu.memory_space<vmem>>, vector<1x1x16x16xf32>
    %20 = vector.shape_cast %19 : vector<1x1x16x16xf32> to vector<16x16xf32>
    %21 = vector.shape_cast %18 : vector<16x16xf32> to vector<1x1x16x16xf32>
    tpu.vector_store %arg6[%c0_18, %c0_19, %c0_20, %c0_21], %21 {strides = array<i32>} : memref<1x1x16x16xf32, #tpu.memory_space<vmem>>, vector<1x1x16x16xf32>,
    return
  }
  func.func @transform_0(%arg0: i32, %arg1: i32, %arg2: i32, %arg3: i32) -> (i32, i32, i32, i32) {
    %c1_i32 = arith.constant 1 : i32
    %0 = arith.muli %arg0, %c1_i32 : i32
    %1 = arith.addi %0, %arg2 : i32
    %c0_i32 = arith.constant 0 : i32
    %c0_i32_0 = arith.constant 0 : i32
    return %1, %arg1, %c0_i32, %arg3 : i32, i32, i32, i32
  }
  func.func @transform_1(%arg0: i32, %arg1: i32, %arg2: i32, %arg3: i32) -> (i32, i32, i32, i32) {
    %c0_i32 = arith.constant 0 : i32
    %c0_i32_0 = arith.constant 0 : i32
    %c0_i32_1 = arith.constant 0 : i32
    return %arg0, %arg1, %c0_i32, %c0_i32_0 : i32, i32, i32, i32
  }
  func.func @transform_2(%arg0: i32, %arg1: i32, %arg2: i32, %arg3: i32) -> (i32, i32, i32, i32) {
    %c0_i32 = arith.constant 0 : i32
    %c0_i32_0 = arith.constant 0 : i32
    %c0_i32_1 = arith.constant 0 : i32
    return %arg0, %arg1, %c0_i32, %c0_i32_0 : i32, i32, i32, i32
  }
}

module attributes {stable_mosaic.version = 11 : i64} {
  func.func @_apply_kernel(%arg0: i32, %arg1: i32, %arg2: i32, %arg3: memref<1x1x16x128xf32, #tpu.memory_space<vmem>>, %arg4: memref<1x16x16xf32, #tpu.memory_space<vmem>>, %arg5: memref<1x16x1xf32, #tpu.memory_space<vmem>>, %arg6: memref<1x1x16x128xf32, #tpu.memory_space<vmem>>) attributes {dimension_semantics = [#tpu.dimension_semantics<parallel>, #tpu.dimension_semantics<parallel>, #tpu.dimension_semantics<parallel>], iteration_bounds = array<i64: 1, 2, 2>, scalar_prefetch = 0 : i64, scratch_operands = 0 : i64, tpu.core_type = #tpu.core_type<tc>, window_params = [{transform_indices = @transform_0, window_bounds = array<i64: 1, 1, 16, 128>}, {transform_indices = @transform_1, window_bounds = array<i64: 1, 16, 16>}, {transform_indices = @transform_2, window_bounds = array<i64: 1, 16, 1>}, {transform_indices = @transform_3, window_bounds = array<i64: 1, 1, 16, 128>}]} {
    %c0 = arith.constant 0 : index
    %c0_0 = arith.constant 0 : index
    %c0_1 = arith.constant 0 : index
    %0 = vector.load %arg4[%c0, %c0_0, %c0_1] : memref<1x16x16xf32, #tpu.memory_space<vmem>>, vector<1x16x16xf32>
    %1 = vector.shape_cast %0 : vector<1x16x16xf32> to vector<16x16xf32>
    %c0_2 = arith.constant 0 : index
    %c0_3 = arith.constant 0 : index
    %c0_4 = arith.constant 0 : index
    %c0_5 = arith.constant 0 : index
    %2 = vector.load %arg3[%c0_2, %c0_3, %c0_4, %c0_5] : memref<1x1x16x128xf32, #tpu.memory_space<vmem>>, vector<1x1x16x128xf32>
    %3 = vector.shape_cast %2 : vector<1x1x16x128xf32> to vector<16x128xf32>
    %cst = arith.constant dense<0.000000e+00> : vector<16x128xf32>
    %4 = tpu.matmul %1, %3, %cst {dimension_numbers = #tpu.dot_dimension_numbers<[1], [0], [0], [1], [0, 0, 1, 1], [], []>} : vector<16x16xf32>, vector<16x128xf32>, vector<16x128xf32> -> vector<16x128xf32>
    %c0_6 = arith.constant 0 : index
    %c0_7 = arith.constant 0 : index
    %c0_8 = arith.constant 0 : index
    %5 = vector.load %arg5[%c0_6, %c0_7, %c0_8] : memref<1x16x1xf32, #tpu.memory_space<vmem>>, vector<1x16x1xf32>
    %6 = vector.shape_cast %5 : vector<1x16x1xf32> to vector<16x1xf32>
    %7 = vector.broadcast %6 : vector<16x1xf32> to vector<16x128xf32>
    %8 = arith.addf %4, %7 : vector<16x128xf32>
    %c0_9 = arith.constant 0 : index
    %c0_10 = arith.constant 0 : index
    %c0_11 = arith.constant 0 : index
    %c0_12 = arith.constant 0 : index
    %9 = vector.load %arg6[%c0_9, %c0_10, %c0_11, %c0_12] : memref<1x1x16x128xf32, #tpu.memory_space<vmem>>, vector<1x1x16x128xf32>
    %10 = vector.shape_cast %9 : vector<1x1x16x128xf32> to vector<16x128xf32>
    %11 = vector.shape_cast %8 : vector<16x128xf32> to vector<1x1x16x128xf32>
    tpu.vector_store %arg6[%c0_9, %c0_10, %c0_11, %c0_12], %11 {strides = array<i32>} : memref<1x1x16x128xf32, #tpu.memory_space<vmem>>, vector<1x1x16x128xf32>,
    return
  }
  func.func @transform_0(%arg0: i32, %arg1: i32, %arg2: i32) -> (i32, i32, i32, i32) {
    %c0_i32 = arith.constant 0 : i32
    %c0_i32_0 = arith.constant 0 : i32
    return %arg1, %arg0, %c0_i32, %arg2 : i32, i32, i32, i32
  }
  func.func @transform_1(%arg0: i32, %arg1: i32, %arg2: i32) -> (i32, i32, i32) {
    %c0_i32 = arith.constant 0 : i32
    %c0_i32_0 = arith.constant 0 : i32
    %c0_i32_1 = arith.constant 0 : i32
    return %arg0, %c0_i32, %c0_i32_0 : i32, i32, i32
  }
  func.func @transform_2(%arg0: i32, %arg1: i32, %arg2: i32) -> (i32, i32, i32) {
    %c0_i32 = arith.constant 0 : i32
    %c0_i32_0 = arith.constant 0 : i32
    %c0_i32_1 = arith.constant 0 : i32
    return %arg0, %c0_i32, %c0_i32_0 : i32, i32, i32
  }
  func.func @transform_3(%arg0: i32, %arg1: i32, %arg2: i32) -> (i32, i32, i32, i32) {
    %c0_i32 = arith.constant 0 : i32
    %c0_i32_0 = arith.constant 0 : i32
    return %arg1, %arg0, %c0_i32, %arg2 : i32, i32, i32, i32
  }
}

</mosaic_0001>

<llo_original>
// kernel: _iternorm_train.2
$region0: #{_iternorm_train.2}
  #allocation0 [shape = 'u32[]', space=smem, size = 0x4, offset = 0x4, fixed_abs, tag = 'smem constant byte address 0x4 - core index']
  #allocation1 [shape = 'u32[144,128]{1,0:T(1,128)}', space=vmem, size = 0x12000, scoped, tag = 'internal scratch']
  %s0 = inlined_call_operand.vmem [shape: f32[2,1,16,256], index: 0, kind: input, shape index: {}]
  %s1 = inlined_call_operand.vmem [shape: f32[2,1,16,1], index: 1, kind: output, shape index: {0}]
  %s2 = inlined_call_operand.vmem [shape: f32[2,1,16,16], index: 2, kind: output, shape index: {1}]
  %3 = xla_tuple %s1, %s2
  %s4 = sld [smem:[#allocation0]]
  $region87: #{_iternorm_train.2} parent=0
    _
  %s6 = ssub.s32 1, %s4
  %s7 = scalar_select 0, %s6, %s4
  $region1: #{_iternorm_train.2} parent=0
    #allocation2 [shape = 'u8[16384]{0}', space=vmem, size = 0x4000, scoped, tag = 'input window, operand 0']
    loop: start=0, step=1, limit=6
    $region2: #{_iternorm_train.2} parent=1 // loop_pre_header
      _
    $region3: #{_iternorm_train.2} parent=1 // loop_header
      %s9 = sphi 0, %s13
      %p10 = scmp.ge.s32.totalorder %s9, 6
      %s16 = sphi 0, %s42
      %s17 = sphi 0, %s38
      %s18 = sphi 0, %s34
      %s19 = sphi 0, %s30
      %s20 = sphi 0, %s16
      %s21 = sphi 0, %s17
      %s22 = sphi 0, %s18
      %s23 = sphi 0, %s19
      %s24 = sphi 0, %s20
      %s25 = sphi 0, %s21
      %s26 = sphi 0, %s22
      %s27 = sphi 0, %s23
      %s51 = sphi 0, %s53
      %s54 = sphi 0, %s51
      %s55 = sphi 0, %s54
      %s71 = sphi 0, %s55
      %s79 = sphi 0, %s81
      %s82 = sphi 0, %s79
      %s83 = sphi 0, %s82
      %s99 = sphi 0, %s83
      %s107 = sphi 0, %s109
      %s110 = sphi 0, %s107
      %s111 = sphi 0, %s110
      %s127 = sphi 0, %s111
    $region4: #{_iternorm_train.2} parent=1 // loop_header_branch
      %12 = sbr.rel (%p10) target = $region8
    $region5: #{_iternorm_train.2} parent=1 // loop_body
      %s14 = ssub.s32 %s9, 1
      %s15 = ssub.s32 %s9, 2
      %s28 = sadd.s32 1, %s19
      %p29 = scmp.ge.s32.totalorder %s28, 2
      %s30 = scalar_select %p29, 0, %s28
      %s31 = sadd.s32 1, %s18
      %s32 = scalar_select %p29, %s31, %s18
      %p33 = scmp.ge.s32.totalorder %s32, 1
      %s34 = scalar_select %p33, 0, %s32
      %s35 = sadd.s32 1, %s17
      %s36 = scalar_select %p33, %s35, %s17
      %p37 = scmp.ge.s32.totalorder %s36, 1
      %s38 = scalar_select %p37, 0, %s36
      %s39 = sadd.s32 1, %s16
      %s40 = scalar_select %p37, %s39, %s16
      %p41 = scmp.ge.s32.totalorder %s40, 2
      %s42 = scalar_select %p41, 0, %s40
      %s43 = sadd.s32 %s16, %s18
      %s44 = sadd.s32 %s42, %s34
      %s45 = ssub.s32 %s43, %s44
      %s46 = ssub.s32 %s17, %s38
      %s47 = sor.u32 %s45, %s46
      %s48 = ssub.s32 %s19, %s30
      %s49 = sor.u32 %s47, %s48
      %p50 = scmp.eq.s32.totalorder %s49, 0
      %s52 = sadd.s32 %s51, 1
      %s53 = scalar_select %p50, %s51, %s52
      %p56 = pneg %p50
      %p57 = scmp.eq.s32.totalorder %s9, 3
      %p58 = por %p56, %p57
      %p59 = scmp.ne.s32.totalorder %s51, %s54
      %p60 = scmp.eq.s32.totalorder %s9, 0
      %p61 = por %p59, %p60
      %p62 = scmp.ne.s32.totalorder %s51, %s54
      %p63 = scmp.eq.s32.totalorder %s14, 3
      %p64 = por %p62, %p63
      %p65 = scmp.ne.s32.totalorder %s54, %s55
      %p66 = scmp.eq.s32.totalorder %s14, 0
      %p67 = por %p65, %p66
      %p68 = scmp.ne.s32.totalorder %s54, %s55
      %p69 = scmp.eq.s32.totalorder %s15, 3
      %p70 = por %p68, %p69
      %p72 = scmp.ne.s32.totalorder %s55, %s71
      %p73 = scmp.eq.s32.totalorder %s15, 0
      %p74 = por %p72, %p73
      %s75 = ssub.s32 %s16, %s42
      %s76 = ssub.s32 %s17, %s38
      %s77 = sor.u32 %s75, %s76
      %p78 = scmp.eq.s32.totalorder %s77, 0
      %s80 = sadd.s32 %s79, 1
      %s81 = scalar_select %p78, %s79, %s80
      %p84 = pneg %p78
      %p85 = scmp.eq.s32.totalorder %s9, 3
      %p86 = por %p84, %p85
      %p87 = scmp.ne.s32.totalorder %s79, %s82
      %p88 = scmp.eq.s32.totalorder %s9, 0
      %p89 = por %p87, %p88
      %p90 = scmp.ne.s32.totalorder %s79, %s82
      %p91 = scmp.eq.s32.totalorder %s14, 3
      %p92 = por %p90, %p91
      %p93 = scmp.ne.s32.totalorder %s82, %s83
      %p94 = scmp.eq.s32.totalorder %s14, 0
      %p95 = por %p93, %p94
      %p96 = scmp.ne.s32.totalorder %s82, %s83
      %p97 = scmp.eq.s32.totalorder %s15, 3
      %p98 = por %p96, %p97
      %p100 = scmp.ne.s32.totalorder %s83, %s99
      %p101 = scmp.eq.s32.totalorder %s15, 0
      %p102 = por %p100, %p101
      %s103 = ssub.s32 %s16, %s42
      %s104 = ssub.s32 %s17, %s38
      %s105 = sor.u32 %s103, %s104
      %p106 = scmp.eq.s32.totalorder %s105, 0
      %s108 = sadd.s32 %s107, 1
      %s109 = scalar_select %p106, %s107, %s108
      %p112 = pneg %p106
      %p113 = scmp.eq.s32.totalorder %s9, 3
      %p114 = por %p112, %p113
      %p115 = scmp.ne.s32.totalorder %s107, %s110
      %p116 = scmp.eq.s32.totalorder %s9, 0
      %p117 = por %p115, %p116
      %p118 = scmp.ne.s32.totalorder %s107, %s110
      %p119 = scmp.eq.s32.totalorder %s14, 3
      %p120 = por %p118, %p119
      %p121 = scmp.ne.s32.totalorder %s110, %s111
      %p122 = scmp.eq.s32.totalorder %s14, 0
      %p123 = por %p121, %p122
      %p124 = scmp.ne.s32.totalorder %s110, %s111
      %p125 = scmp.eq.s32.totalorder %s15, 3
      %p126 = por %p124, %p125
      %p128 = scmp.ne.s32.totalorder %s111, %s127
      %p129 = scmp.eq.s32.totalorder %s15, 0
      %p130 = por %p128, %p129
      %p131 = scmp.le.s32.totalorder 1, %s9
      %p132 = scmp.lt.s32.totalorder %s9, 5
      %p133 = pnand %p131, %p132
      %p134 = pneg %p133
      // Predicated region
      $region9: #{_iternorm_train.2} parent=5 // pred_check
        _
      $region10: #{_iternorm_train.2} parent=5 // pred_check_branch
        %136 = sbr.rel (%p133) target = $region12
      $region11: #{_iternorm_train.2} parent=5 // pred_region
        %s137 = ssub.s32 %s9, 1
      $region12: #{_iternorm_train.2} parent=5 // pred_fallthru
        _
      %p138 = scmp.lt.s32.totalorder %s9, 4
      // Predicated region
      $region13: #{_iternorm_train.2} parent=5 // pred_check
        %p139 = pneg %p138
      $region14: #{_iternorm_train.2} parent=5 // pred_check_branch
        %141 = sbr.rel (%p139) target = $region16
      $region15: #{_iternorm_train.2} parent=5 // pred_region
        // Predicated region
        $region17: #{_iternorm_train.2} parent=15 // pred_check
          %p142 = pneg %p61
        $region18: #{_iternorm_train.2} parent=15 // pred_check_branch
          %144 = sbr.rel (%p142) target = $region20
        $region19: #{_iternorm_train.2} parent=15 // pred_region
          %s145 = sand.u32 %s51, 1
          %s146 = sand.u32 %s51, 1
          %s147 = smul.addr %s146, 16
          %s148 = scalar_lea.vmem [#allocation2], %s147
          %s149 = sadd.s32 %s16, %s18
          %s150 = smul.addr %s17, 4
          %s151 = sadd.s32 %s19, %s150
          %s152 = smul.addr %s149, 4
          %s153 = sadd.s32 %s151, %s152
          %s154 = smul.addr %s153, 8
          %s155 = scalar_lea.vmem %s0, %s154
          // Predicated region
          $region21: #{_iternorm_train.2} parent=19 // pred_check
            _
          $region22: #{_iternorm_train.2} parent=19 // pred_check_branch
            %157 = sbr.rel (0) target = $region24
          $region23: #{_iternorm_train.2} parent=19 // pred_region
            // Predicated region
            $region25: #{_iternorm_train.2} parent=23 // pred_check
              _
            $region26: #{_iternorm_train.2} parent=23 // pred_check_branch
              %159 = sbr.rel (0) target = $region28
            $region27: #{_iternorm_train.2} parent=23 // pred_region
              // Predicated region
              $region40: #{_iternorm_train.2} parent=27 // pred_check
                _
              $region41: #{_iternorm_train.2} parent=27 // pred_check_branch
                %176 = sbr.rel (0) target = $region43
              $region42: #{_iternorm_train.2} parent=27 // pred_region
                loop: start=0, step=1, limit=1
                $region44: #{_iternorm_train.2} parent=42 // loop_pre_header
                  _
                $region45: #{_iternorm_train.2} parent=42 // loop_header
                  %s178 = sphi 0, %s182
                  %p179 = scmp.ge.s32.totalorder %s178, 1
                  %s183 = sphi %s155, %s155
                  %s184 = sphi %s148, %s148
                $region46: #{_iternorm_train.2} parent=42 // loop_header_branch
                  %181 = sbr.rel (%p179) target = $region50
                $region47: #{_iternorm_train.2} parent=42 // loop_body
                  %v185 = vld [vmem:[%s183] sm:$0xff]
                  %186 = vst [vmem:[%s184] sm:$0xff] %v185
                  %v187 = vld [vmem:[%s183 + $0x10] sm:$0xff]
                  %188 = vst [vmem:[%s184 + $0x8] sm:$0xff] %v187
                $region48: #{_iternorm_train.2} parent=42 // loop_footer
                  %s182 = sadd.s32 1, %s178
                $region49: #{_iternorm_train.2} parent=42 // loop_footer_branch
                  %177 = sbr.rel target = $region45
                $region50: #{_iternorm_train.2} parent=42 // loop_exit
                  _
              $region43: #{_iternorm_train.2} parent=27 // pred_fallthru
                _
              // Predicated region
              $region51: #{_iternorm_train.2} parent=27 // pred_check
                _
              $region52: #{_iternorm_train.2} parent=27 // pred_check_branch
                %190 = sbr.rel target = $region54
              $region53: #{_iternorm_train.2} parent=27 // pred_region
                _
              $region54: #{_iternorm_train.2} parent=27 // pred_fallthru
                _
            $region28: #{_iternorm_train.2} parent=23 // pred_fallthru
              _
            // Predicated region
            $region29: #{_iternorm_train.2} parent=23 // pred_check
              _
            $region30: #{_iternorm_train.2} parent=23 // pred_check_branch
              %161 = sbr.rel target = $region32
            $region31: #{_iternorm_train.2} parent=23 // pred_region
              loop: start=0, step=1, limit=1
              $region33: #{_iternorm_train.2} parent=31 // loop_pre_header
                _
              $region34: #{_iternorm_train.2} parent=31 // loop_header
                %s164 = sphi 0, %s168
                %p165 = scmp.ge.s32.totalorder %s164, 1
                %s169 = sphi %s155, %s155
                %s170 = sphi %s148, %s148
              $region35: #{_iternorm_train.2} parent=31 // loop_header_branch
                %167 = sbr.rel (%p165) target = $region39
              $region36: #{_iternorm_train.2} parent=31 // loop_body
                %v171 = vld [vmem:[%s169] sm:$0xff]
                %172 = vst [vmem:[%s170] sm:$0xff] %v171
                %v173 = vld [vmem:[%s169 + $0x10] sm:$0xff]
                %174 = vst [vmem:[%s170 + $0x8] sm:$0xff] %v173
              $region37: #{_iternorm_train.2} parent=31 // loop_footer
                %s168 = sadd.s32 1, %s164
              $region38: #{_iternorm_train.2} parent=31 // loop_footer_branch
                %163 = sbr.rel target = $region34
              $region39: #{_iternorm_train.2} parent=31 // loop_exit
                _
            $region32: #{_iternorm_train.2} parent=23 // pred_fallthru
              _
          $region24: #{_iternorm_train.2} parent=19 // pred_fallthru
            _
          %191 = vnop
        $region20: #{_iternorm_train.2} parent=15 // pred_fallthru
          _
      $region16: #{_iternorm_train.2} parent=5 // pred_fallthru
        _
      %p192 = scmp.le.s32.totalorder 1, %s9
      %p193 = scmp.lt.s32.totalorder %s9, 5
      %p194 = pnand %p192, %p193
      %p195 = pneg %p194
      // Predicated region
      $region55: #{_iternorm_train.2} parent=5 // pred_check
        _
      $region56: #{_iternorm_train.2} parent=5 // pred_check_branch
        %197 = sbr.rel (%p194) target = $region58
      $region57: #{_iternorm_train.2} parent=5 // pred_region
        %s198 = ssub.s32 %s9, 1
        %s199 = sand.u32 %s54, 1
        %s200 = sand.u32 %s54, 1
        %s201 = smul.addr %s200, 16
        %s202 = scalar_lea.vmem [#allocation2], %s201
        // Predicated region
        $region59: #{_iternorm_train.2} parent=57 // pred_check
          %p203 = pneg %p67
        $region60: #{_iternorm_train.2} parent=57 // pred_check_branch
          %205 = sbr.rel (%p203) target = $region62
        $region61: #{_iternorm_train.2} parent=57 // pred_region
          _
        $region62: #{_iternorm_train.2} parent=57 // pred_fallthru
          _
        %s206 = sand.u32 %s54, 1
        %s207 = sand.u32 %s54, 1
        %s208 = smul.addr %s207, 16
        %s209 = scalar_lea.vmem [#allocation2], %s208
        %p210 = pneg %p67
        %p211 = pneg %p64
        %p212 = pneg %p95
        %p213 = pneg %p92
        %p214 = scmp.lt.s32.totalorder %s20, 1
        %s215 = scalar_select %p214, %s20, 1
        %p216 = scmp.lt.s32.totalorder %s21, 0
        %s217 = scalar_select %p216, %s21, 0
        %s218 = smul.addr %s217, 2
        %s219 = smul.addr %s215, 2
        %s220 = sadd.s32 %s218, %s219
        %s221 = smul.addr %s220, 8
        %s222 = scalar_lea.vmem %s1, %s221
        %p223 = pneg %p123
        %p224 = pneg %p120
        %p225 = scmp.lt.s32.totalorder %s20, 1
        %s226 = scalar_select %p225, %s20, 1
        %p227 = scmp.lt.s32.totalorder %s21, 0
        %s228 = scalar_select %p227, %s21, 0
        %s229 = smul.addr %s228, 2
        %s230 = smul.addr %s226, 2
        %s231 = sadd.s32 %s229, %s230
        %s232 = smul.addr %s231, 8
        %s233 = scalar_lea.vmem %s2, %s232
        %s234 = sadd.s32 %s20, %s22
        %p235 = scmp.lt.s32.totalorder %s20, 1
        %s236 = scalar_select %p235, %s20, 1
        %p237 = scmp.lt.s32.totalorder %s21, 0
        %s238 = scalar_select %p237, %s21, 0
        %s239 = smul.addr %s238, 2
        %s240 = smul.addr %s236, 2
        %s241 = sadd.s32 %s239, %s240
        %s242 = smul.addr %s241, 8
        %s243 = scalar_lea.vmem %s1, %s242
        %p244 = scmp.lt.s32.totalorder %s20, 1
        %s245 = scalar_select %p244, %s20, 1
        %p246 = scmp.lt.s32.totalorder %s21, 0
        %s247 = scalar_select %p246, %s21, 0
        %s248 = smul.addr %s247, 2
        %s249 = smul.addr %s245, 2
        %s250 = sadd.s32 %s248, %s249
        %s251 = smul.addr %s250, 8
        %s252 = scalar_lea.vmem %s2, %s251
        %p253 = scmp.eq.s32.totalorder %s22, 0
        %p254 = scmp.eq.s32.totalorder %s23, 0
        %p255 = pnand %p253, %p254
        %p256 = pneg %p255
        // Predicated region
        $region63: #{_iternorm_train.2} parent=57 // pred_check
          _
        $region64: #{_iternorm_train.2} parent=57 // pred_check_branch
          %258 = sbr.rel (%p255) target = $region66
        $region65: #{_iternorm_train.2} parent=57 // pred_region
          %vm259 = vcmask 7168
          %260 = vst.msk [vmem:[%s243] sm:$0xff] %vm259, 0.0
          %261 = vst.msk [vmem:[%s243 + $0x8] sm:$0xff] %vm259, 0.0
          %vm262 = vcmask 130048
          %263 = vst.msk [vmem:[%s252] sm:$0xff] %vm262, 0.0
          %264 = vst.msk [vmem:[%s252 + $0x8] sm:$0xff] %vm262, 0.0
        $region66: #{_iternorm_train.2} parent=57 // pred_fallthru
          _
        %v265 = vld [vmem:[%s202] sm:$0xff]
        %v266 = vld [vmem:[%s202 + $0x8] sm:$0xff]
        %v267 = vld [vmem:[%s243] sm:$0xff]
        %v268 = vld [vmem:[%s243 + $0x8] sm:$0xff]
        %269 = vadd.xlane.f32.xlu0 %v265
        %v270 = vpop.xlane.xlu0 %269
        %271 = vadd.xlane.f32.xlu0 %v266
        %v272 = vpop.xlane.xlu0 %271
        %v273 = vadd.f32 %v267, %v270
        %v274 = vadd.f32 %v268, %v272
        %vm275 = vcmask 7168
        %276 = vst.msk [vmem:[%s243] sm:$0xff] %vm275, %v273
        %277 = vst.msk [vmem:[%s243 + $0x8] sm:$0xff] %vm275, %v274
        %v278 = vld [vmem:[%s252] sm:$0xff]
        %v279 = vld [vmem:[%s252 + $0x8] sm:$0xff]
        %280 = vmatprep.subr.mxu0 0.0
        %281 = vmatpush1.xpose.msra.mxu0 %v265
        %282 = vmatprep.subr.mxu0 0.0
        %283 = vmatpush1.xpose.msra.mxu0 %v266
        %284 = vmatprep.subr.mxu0 0.0
        %285 = vmatpush1.xpose.msra.mxu0 0.0
        %286 = vmatprep.subr.mxu0 0.0
        %287 = vmatpush1.xpose.msra.mxu0 0.0
        %288 = vmatprep.subr.mxu0 0.0
        %289 = vmatpush1.xpose.msra.mxu0 0.0
        %290 = vmatprep.subr.mxu0 0.0
        %291 = vmatpush1.xpose.msra.mxu0 0.0
        %292 = vmatprep.subr.mxu0 0.0
        %293 = vmatpush1.xpose.msra.mxu0 0.0
        %294 = vmatprep.subr.mxu0 0.0
        %295 = vmatpush1.xpose.msra.mxu0 0.0
        %296 = vmatprep.subr.mxu0 0.0
        %297 = vmatpush1.xpose.msra.mxu0 0.0
        %298 = vmatprep.subr.mxu0 0.0
        %299 = vmatpush1.xpose.msra.mxu0 0.0
        %300 = vmatprep.subr.mxu0 0.0
        %301 = vmatpush1.xpose.msra.mxu0 0.0
        %302 = vmatprep.subr.mxu0 0.0
        %303 = vmatpush1.xpose.msra.mxu0 0.0
        %304 = vmatprep.subr.mxu0 0.0
        %305 = vmatpush1.xpose.msra.mxu0 0.0
        %306 = vmatprep.subr.mxu0 0.0
        %307 = vmatpush1.xpose.msra.mxu0 0.0
        %308 = vmatprep.subr.mxu0 0.0
        %309 = vmatpush1.xpose.msra.mxu0 0.0
        %310 = vmatprep.subr.mxu0 0.0
        %311 = vmatpush1.xpose.msra.mxu0 0.0
        %312 = vmatprep.subr.mxu0 0.0
        %313 = vmatpush1.xpose.msra.mxu0 0.0
        %314 = vmatprep.subr.mxu0 0.0
        %315 = vmatpush1.xpose.msra.mxu0 0.0
        %316 = vmatprep.subr.mxu0 0.0
        %317 = vmatpush1.xpose.msra.mxu0 0.0
        %318 = vmatprep.subr.mxu0 0.0
        %319 = vmatpush1.xpose.msra.mxu0 0.0
        %320 = vmatprep.subr.mxu0 0.0
        %321 = vmatpush1.xpose.msra.mxu0 0.0
        %322 = vmatprep.subr.mxu0 0.0
        %323 = vmatpush1.xpose.msra.mxu0 0.0
        %324 = vmatprep.subr.mxu0 0.0
        %325 = vmatpush1.xpose.msra.mxu0 0.0
        %326 = vmatprep.subr.mxu0 0.0
        %327 = vmatpush1.xpose.msra.mxu0 0.0
        %328 = vmatprep.subr.mxu0 0.0
        %329 = vmatpush1.xpose.msra.mxu0 0.0
        %330 = vmatprep.subr.mxu0 0.0
        %331 = vmatpush1.xpose.msra.mxu0 0.0
        %332 = vmatprep.subr.mxu0 0.0
        %333 = vmatpush1.xpose.msra.mxu0 0.0
        %334 = vmatprep.subr.mxu0 0.0
        %335 = vmatpush1.xpose.msra.mxu0 0.0
        %336 = vmatprep.subr.mxu0 0.0
        %337 = vmatpush1.xpose.msra.mxu0 0.0
        %338 = vmatprep.subr.mxu0 0.0
        %339 = vmatpush1.xpose.msra.mxu0 0.0
        %340 = vmatprep.subr.mxu0 0.0
        %341 = vmatpush1.xpose.msra.mxu0 0.0
        %342 = vmatprep.subr.mxu0 0.0
        %343 = vmatpush1.xpose.msra.mxu0 0.0
        %344 = vmatprep.mubr.f32.mxu0 0.0
        %345 = vmatmul.mubr.f32.gmra.mrb[0].mxu0 %v265
        %v346 = vpop.f32.mrb[0].mxu0
        %v347 = vadd.f32 0.0, %v346
        %v348 = vpop.f32.mrb[0].mxu0
        %349 = vmatprep.mubr.f32.mxu0 0.0
        %350 = vmatmul.mubr.f32.gmra.mrb[0].mxu0 %v266
        %v351 = vpop.f32.mrb[0].mxu0
        %v352 = vadd.f32 0.0, %v351
        %v353 = vpop.f32.mrb[0].mxu0
        %354 = vdwg.mxu0
        %v355 = vadd.f32 %v278, %v347
        %v356 = vadd.f32 %v279, %v352
        %vm357 = vcmask 130048
        %358 = vst.msk [vmem:[%s252] sm:$0xff] %vm357, %v355
        %359 = vst.msk [vmem:[%s252 + $0x8] sm:$0xff] %vm357, %v356
        %p360 = scmp.lt.s32.totalorder %s20, 1
        %s361 = scalar_select %p360, %s20, 1
        %p362 = scmp.lt.s32.totalorder %s21, 0
        %s363 = scalar_select %p362, %s21, 0
        %s364 = smul.addr %s363, 2
        %s365 = smul.addr %s361, 2
        %s366 = sadd.s32 %s364, %s365
        %s367 = smul.addr %s366, 8
        %s368 = scalar_lea.vmem %s1, %s367
        %p369 = scmp.lt.s32.totalorder %s20, 1
        %s370 = scalar_select %p369, %s20, 1
        %p371 = scmp.lt.s32.totalorder %s21, 0
        %s372 = scalar_select %p371, %s21, 0
        %s373 = smul.addr %s372, 2
        %s374 = smul.addr %s370, 2
        %s375 = sadd.s32 %s373, %s374
        %s376 = smul.addr %s375, 8
        %s377 = scalar_lea.vmem %s2, %s376
        // Predicated region
        $region67: #{_iternorm_train.2} parent=57 // pred_check
          %p378 = pneg %p92
        $region68: #{_iternorm_train.2} parent=57 // pred_check_branch
          %380 = sbr.rel (%p378) target = $region70
        $region69: #{_iternorm_train.2} parent=57 // pred_region
          _
        $region70: #{_iternorm_train.2} parent=57 // pred_fallthru
          _
        // Predicated region
        $region71: #{_iternorm_train.2} parent=57 // pred_check
          %p381 = pneg %p120
        $region72: #{_iternorm_train.2} parent=57 // pred_check_branch
          %383 = sbr.rel (%p381) target = $region74
        $region73: #{_iternorm_train.2} parent=57 // pred_region
          _
        $region74: #{_iternorm_train.2} parent=57 // pred_fallthru
          _
      $region58: #{_iternorm_train.2} parent=5 // pred_fallthru
        _
      %p384 = scmp.le.s32.totalorder 2, %s9
      // Predicated region
      $region75: #{_iternorm_train.2} parent=5 // pred_check
        %p385 = pneg %p384
      $region76: #{_iternorm_train.2} parent=5 // pred_check_branch
        %387 = sbr.rel (%p385) target = $region78
      $region77: #{_iternorm_train.2} parent=5 // pred_region
        %s388 = ssub.s32 %s9, 2
        // Predicated region
        $region79: #{_iternorm_train.2} parent=77 // pred_check
          %p389 = pneg %p98
        $region80: #{_iternorm_train.2} parent=77 // pred_check_branch
          %391 = sbr.rel (%p389) target = $region82
        $region81: #{_iternorm_train.2} parent=77 // pred_region
          %p392 = scmp.lt.s32.totalorder %s24, 1
          %s393 = scalar_select %p392, %s24, 1
          %p394 = scmp.lt.s32.totalorder %s25, 0
          %s395 = scalar_select %p394, %s25, 0
          %s396 = smul.addr %s395, 2
          %s397 = smul.addr %s393, 2
          %s398 = sadd.s32 %s396, %s397
          %s399 = smul.addr %s398, 8
          %s400 = scalar_lea.vmem %s1, %s399
        $region82: #{_iternorm_train.2} parent=77 // pred_fallthru
          _
        // Predicated region
        $region83: #{_iternorm_train.2} parent=77 // pred_check
          %p401 = pneg %p126
        $region84: #{_iternorm_train.2} parent=77 // pred_check_branch
          %403 = sbr.rel (%p401) target = $region86
        $region85: #{_iternorm_train.2} parent=77 // pred_region
          %p404 = scmp.lt.s32.totalorder %s24, 1
          %s405 = scalar_select %p404, %s24, 1
          %p406 = scmp.lt.s32.totalorder %s25, 0
          %s407 = scalar_select %p406, %s25, 0
          %s408 = smul.addr %s407, 2
          %s409 = smul.addr %s405, 2
          %s410 = sadd.s32 %s408, %s409
          %s411 = smul.addr %s410, 8
          %s412 = scalar_lea.vmem %s2, %s411
        $region86: #{_iternorm_train.2} parent=77 // pred_fallthru
          _
      $region78: #{_iternorm_train.2} parent=5 // pred_fallthru
        _
    $region6: #{_iternorm_train.2} parent=1 // loop_footer
      %s13 = sadd.s32 1, %s9
    $region7: #{_iternorm_train.2} parent=1 // loop_footer_branch
      %8 = sbr.rel target = $region3
    $region8: #{_iternorm_train.2} parent=1 // loop_exit
      _

// kernel: _iternorm_train.3
$region0: #{_iternorm_train.3}
  #allocation0 [shape = 'u32[]', space=smem, size = 0x4, offset = 0x4, fixed_abs, tag = 'smem constant byte address 0x4 - core index']
  #allocation1 [shape = 'u32[144,128]{1,0:T(1,128)}', space=vmem, size = 0x12000, scoped, tag = 'internal scratch']
  %s0 = inlined_call_operand.vmem [shape: f32[2,1,16,256], index: 0, kind: input, shape index: {}]
  %s1 = inlined_call_operand.vmem [shape: f32[1,16,16], index: 1, kind: input, shape index: {}]
  %s2 = inlined_call_operand.vmem [shape: f32[1,16,1], index: 2, kind: input, shape index: {}]
  %s3 = inlined_call_operand.vmem [shape: f32[2,1,16,256], index: 3, kind: output, shape index: {}]
  %s4 = sld [smem:[#allocation0]]
  $region117: #{_iternorm_train.3} parent=0
    _
  %s6 = ssub.s32 1, %s4
  %s7 = scalar_select 0, %s6, %s4
  $region1: #{_iternorm_train.3} parent=0
    #allocation2 [shape = 'u8[16384]{0}', space=vmem, size = 0x4000, scoped, tag = 'input window, operand 0']
    #allocation3 [shape = 'u8[16384]{0}', space=vmem, size = 0x4000, scoped, tag = 'output window, operand 0']
    loop: start=0, step=1, limit=6
    $region2: #{_iternorm_train.3} parent=1 // loop_pre_header
      _
    $region3: #{_iternorm_train.3} parent=1 // loop_header
      %s9 = sphi 0, %s13
      %p10 = scmp.ge.s32.totalorder %s9, 6
      %s16 = sphi 0, %s35
      %s17 = sphi 0, %s31
      %s18 = sphi 0, %s27
      %s19 = sphi 0, %s16
      %s20 = sphi 0, %s17
      %s21 = sphi 0, %s18
      %s22 = sphi 0, %s19
      %s23 = sphi 0, %s20
      %s24 = sphi 0, %s21
      %s42 = sphi 0, %s44
      %s45 = sphi 0, %s42
      %s46 = sphi 0, %s45
      %s62 = sphi 0, %s46
      %s68 = sphi 0, %s70
      %s71 = sphi 0, %s68
      %s72 = sphi 0, %s71
      %s88 = sphi 0, %s72
      %s94 = sphi 0, %s96
      %s97 = sphi 0, %s94
      %s98 = sphi 0, %s97
      %s114 = sphi 0, %s98
      %s124 = sphi 0, %s126
      %s127 = sphi 0, %s124
      %s128 = sphi 0, %s127
      %s144 = sphi 0, %s128
    $region4: #{_iternorm_train.3} parent=1 // loop_header_branch
      %12 = sbr.rel (%p10) target = $region8
    $region5: #{_iternorm_train.3} parent=1 // loop_body
      %s14 = ssub.s32 %s9, 1
      %s15 = ssub.s32 %s9, 2
      %s25 = sadd.s32 1, %s18
      %p26 = scmp.ge.s32.totalorder %s25, 2
      %s27 = scalar_select %p26, 0, %s25
      %s28 = sadd.s32 1, %s17
      %s29 = scalar_select %p26, %s28, %s17
      %p30 = scmp.ge.s32.totalorder %s29, 2
      %s31 = scalar_select %p30, 0, %s29
      %s32 = sadd.s32 1, %s16
      %s33 = scalar_select %p30, %s32, %s16
      %p34 = scmp.ge.s32.totalorder %s33, 1
      %s35 = scalar_select %p34, 0, %s33
      %s36 = ssub.s32 %s17, %s31
      %s37 = ssub.s32 %s16, %s35
      %s38 = sor.u32 %s36, %s37
      %s39 = ssub.s32 %s18, %s27
      %s40 = sor.u32 %s38, %s39
      %p41 = scmp.eq.s32.totalorder %s40, 0
      %s43 = sadd.s32 %s42, 1
      %s44 = scalar_select %p41, %s42, %s43
      %p47 = pneg %p41
      %p48 = scmp.eq.s32.totalorder %s9, 3
      %p49 = por %p47, %p48
      %p50 = scmp.ne.s32.totalorder %s42, %s45
      %p51 = scmp.eq.s32.totalorder %s9, 0
      %p52 = por %p50, %p51
      %p53 = scmp.ne.s32.totalorder %s42, %s45
      %p54 = scmp.eq.s32.totalorder %s14, 3
      %p55 = por %p53, %p54
      %p56 = scmp.ne.s32.totalorder %s45, %s46
      %p57 = scmp.eq.s32.totalorder %s14, 0
      %p58 = por %p56, %p57
      %p59 = scmp.ne.s32.totalorder %s45, %s46
      %p60 = scmp.eq.s32.totalorder %s15, 3
      %p61 = por %p59, %p60
      %p63 = scmp.ne.s32.totalorder %s46, %s62
      %p64 = scmp.eq.s32.totalorder %s15, 0
      %p65 = por %p63, %p64
      %s66 = ssub.s32 %s16, %s35
      %p67 = scmp.eq.s32.totalorder %s66, 0
      %s69 = sadd.s32 %s68, 1
      %s70 = scalar_select %p67, %s68, %s69
      %p73 = pneg %p67
      %p74 = scmp.eq.s32.totalorder %s9, 3
      %p75 = por %p73, %p74
      %p76 = scmp.ne.s32.totalorder %s68, %s71
      %p77 = scmp.eq.s32.totalorder %s9, 0
      %p78 = por %p76, %p77
      %p79 = scmp.ne.s32.totalorder %s68, %s71
      %p80 = scmp.eq.s32.totalorder %s14, 3
      %p81 = por %p79, %p80
      %p82 = scmp.ne.s32.totalorder %s71, %s72
      %p83 = scmp.eq.s32.totalorder %s14, 0
      %p84 = por %p82, %p83
      %p85 = scmp.ne.s32.totalorder %s71, %s72
      %p86 = scmp.eq.s32.totalorder %s15, 3
      %p87 = por %p85, %p86
      %p89 = scmp.ne.s32.totalorder %s72, %s88
      %p90 = scmp.eq.s32.totalorder %s15, 0
      %p91 = por %p89, %p90
      %s92 = ssub.s32 %s16, %s35
      %p93 = scmp.eq.s32.totalorder %s92, 0
      %s95 = sadd.s32 %s94, 1
      %s96 = scalar_select %p93, %s94, %s95
      %p99 = pneg %p93
      %p100 = scmp.eq.s32.totalorder %s9, 3
      %p101 = por %p99, %p100
      %p102 = scmp.ne.s32.totalorder %s94, %s97
      %p103 = scmp.eq.s32.totalorder %s9, 0
      %p104 = por %p102, %p103
      %p105 = scmp.ne.s32.totalorder %s94, %s97
      %p106 = scmp.eq.s32.totalorder %s14, 3
      %p107 = por %p105, %p106
      %p108 = scmp.ne.s32.totalorder %s97, %s98
      %p109 = scmp.eq.s32.totalorder %s14, 0
      %p110 = por %p108, %p109
      %p111 = scmp.ne.s32.totalorder %s97, %s98
      %p112 = scmp.eq.s32.totalorder %s15, 3
      %p113 = por %p111, %p112
      %p115 = scmp.ne.s32.totalorder %s98, %s114
      %p116 = scmp.eq.s32.totalorder %s15, 0
      %p117 = por %p115, %p116
      %s118 = ssub.s32 %s17, %s31
      %s119 = ssub.s32 %s16, %s35
      %s120 = sor.u32 %s118, %s119
      %s121 = ssub.s32 %s18, %s27
      %s122 = sor.u32 %s120, %s121
      %p123 = scmp.eq.s32.totalorder %s122, 0
      %s125 = sadd.s32 %s124, 1
      %s126 = scalar_select %p123, %s124, %s125
      %p129 = pneg %p123
      %p130 = scmp.eq.s32.totalorder %s9, 3
      %p131 = por %p129, %p130
      %p132 = scmp.ne.s32.totalorder %s124, %s127
      %p133 = scmp.eq.s32.totalorder %s9, 0
      %p134 = por %p132, %p133
      %p135 = scmp.ne.s32.totalorder %s124, %s127
      %p136 = scmp.eq.s32.totalorder %s14, 3
      %p137 = por %p135, %p136
      %p138 = scmp.ne.s32.totalorder %s127, %s128
      %p139 = scmp.eq.s32.totalorder %s14, 0
      %p140 = por %p138, %p139
      %p141 = scmp.ne.s32.totalorder %s127, %s128
      %p142 = scmp.eq.s32.totalorder %s15, 3
      %p143 = por %p141, %p142
      %p145 = scmp.ne.s32.totalorder %s128, %s144
      %p146 = scmp.eq.s32.totalorder %s15, 0
      %p147 = por %p145, %p146
      %p148 = scmp.le.s32.totalorder 1, %s9
      %p149 = scmp.lt.s32.totalorder %s9, 5
      %p150 = pnand %p148, %p149
      %p151 = pneg %p150
      // Predicated region
      $region9: #{_iternorm_train.3} parent=5 // pred_check
        _
      $region10: #{_iternorm_train.3} parent=5 // pred_check_branch
        %153 = sbr.rel (%p150) target = $region12
      $region11: #{_iternorm_train.3} parent=5 // pred_region
        %s154 = ssub.s32 %s9, 1
        // Predicated region
        $region13: #{_iternorm_train.3} parent=11 // pred_check
          %p155 = pneg %p84
        $region14: #{_iternorm_train.3} parent=11 // pred_check_branch
          %157 = sbr.rel (%p155) target = $region16
        $region15: #{_iternorm_train.3} parent=11 // pred_region
          %p158 = scmp.lt.s32.totalorder %s19, 0
          %s159 = scalar_select %p158, %s19, 0
          %s160 = smul.addr %s159, 2
          %s161 = smul.addr %s160, 8
          %s162 = scalar_lea.vmem %s1, %s161
        $region16: #{_iternorm_train.3} parent=11 // pred_fallthru
          _
        // Predicated region
        $region17: #{_iternorm_train.3} parent=11 // pred_check
          %p163 = pneg %p110
        $region18: #{_iternorm_train.3} parent=11 // pred_check_branch
          %165 = sbr.rel (%p163) target = $region20
        $region19: #{_iternorm_train.3} parent=11 // pred_region
          %p166 = scmp.lt.s32.totalorder %s19, 0
          %s167 = scalar_select %p166, %s19, 0
          %s168 = smul.addr %s167, 2
          %s169 = smul.addr %s168, 8
          %s170 = scalar_lea.vmem %s2, %s169
        $region20: #{_iternorm_train.3} parent=11 // pred_fallthru
          _
      $region12: #{_iternorm_train.3} parent=5 // pred_fallthru
        _
      %p171 = scmp.lt.s32.totalorder %s9, 4
      // Predicated region
      $region21: #{_iternorm_train.3} parent=5 // pred_check
        %p172 = pneg %p171
      $region22: #{_iternorm_train.3} parent=5 // pred_check_branch
        %174 = sbr.rel (%p172) target = $region24
      $region23: #{_iternorm_train.3} parent=5 // pred_region
        // Predicated region
        $region25: #{_iternorm_train.3} parent=23 // pred_check
          %p175 = pneg %p52
        $region26: #{_iternorm_train.3} parent=23 // pred_check_branch
          %177 = sbr.rel (%p175) target = $region28
        $region27: #{_iternorm_train.3} parent=23 // pred_region
          %s178 = sand.u32 %s42, 1
          %s179 = sand.u32 %s42, 1
          %s180 = smul.addr %s179, 16
          %s181 = scalar_lea.vmem [#allocation2], %s180
          %s182 = smul.addr %s16, 4
          %s183 = sadd.s32 %s18, %s182
          %s184 = smul.addr %s17, 4
          %s185 = sadd.s32 %s183, %s184
          %s186 = smul.addr %s185, 8
          %s187 = scalar_lea.vmem %s0, %s186
          // Predicated region
          $region29: #{_iternorm_train.3} parent=27 // pred_check
            _
          $region30: #{_iternorm_train.3} parent=27 // pred_check_branch
            %189 = sbr.rel (0) target = $region32
          $region31: #{_iternorm_train.3} parent=27 // pred_region
            // Predicated region
            $region33: #{_iternorm_train.3} parent=31 // pred_check
              _
            $region34: #{_iternorm_train.3} parent=31 // pred_check_branch
              %191 = sbr.rel (0) target = $region36
            $region35: #{_iternorm_train.3} parent=31 // pred_region
              // Predicated region
              $region48: #{_iternorm_train.3} parent=35 // pred_check
                _
              $region49: #{_iternorm_train.3} parent=35 // pred_check_branch
                %208 = sbr.rel (0) target = $region51
              $region50: #{_iternorm_train.3} parent=35 // pred_region
                loop: start=0, step=1, limit=1
                $region52: #{_iternorm_train.3} parent=50 // loop_pre_header
                  _
                $region53: #{_iternorm_train.3} parent=50 // loop_header
                  %s210 = sphi 0, %s214
                  %p211 = scmp.ge.s32.totalorder %s210, 1
                  %s215 = sphi %s187, %s187
                  %s216 = sphi %s181, %s181
                $region54: #{_iternorm_train.3} parent=50 // loop_header_branch
                  %213 = sbr.rel (%p211) target = $region58
                $region55: #{_iternorm_train.3} parent=50 // loop_body
                  %v217 = vld [vmem:[%s215] sm:$0xff]
                  %218 = vst [vmem:[%s216] sm:$0xff] %v217
                  %v219 = vld [vmem:[%s215 + $0x10] sm:$0xff]
                  %220 = vst [vmem:[%s216 + $0x8] sm:$0xff] %v219
                $region56: #{_iternorm_train.3} parent=50 // loop_footer
                  %s214 = sadd.s32 1, %s210
                $region57: #{_iternorm_train.3} parent=50 // loop_footer_branch
                  %209 = sbr.rel target = $region53
                $region58: #{_iternorm_train.3} parent=50 // loop_exit
                  _
              $region51: #{_iternorm_train.3} parent=35 // pred_fallthru
                _
              // Predicated region
              $region59: #{_iternorm_train.3} parent=35 // pred_check
                _
              $region60: #{_iternorm_train.3} parent=35 // pred_check_branch
                %222 = sbr.rel target = $region62
              $region61: #{_iternorm_train.3} parent=35 // pred_region
                _
              $region62: #{_iternorm_train.3} parent=35 // pred_fallthru
                _
            $region36: #{_iternorm_train.3} parent=31 // pred_fallthru
              _
            // Predicated region
            $region37: #{_iternorm_train.3} parent=31 // pred_check
              _
            $region38: #{_iternorm_train.3} parent=31 // pred_check_branch
              %193 = sbr.rel target = $region40
            $region39: #{_iternorm_train.3} parent=31 // pred_region
              loop: start=0, step=1, limit=1
              $region41: #{_iternorm_train.3} parent=39 // loop_pre_header
                _
              $region42: #{_iternorm_train.3} parent=39 // loop_header
                %s196 = sphi 0, %s200
                %p197 = scmp.ge.s32.totalorder %s196, 1
                %s201 = sphi %s187, %s187
                %s202 = sphi %s181, %s181
              $region43: #{_iternorm_train.3} parent=39 // loop_header_branch
                %199 = sbr.rel (%p197) target = $region47
              $region44: #{_iternorm_train.3} parent=39 // loop_body
                %v203 = vld [vmem:[%s201] sm:$0xff]
                %204 = vst [vmem:[%s202] sm:$0xff] %v203
                %v205 = vld [vmem:[%s201 + $0x10] sm:$0xff]
                %206 = vst [vmem:[%s202 + $0x8] sm:$0xff] %v205
              $region45: #{_iternorm_train.3} parent=39 // loop_footer
                %s200 = sadd.s32 1, %s196
              $region46: #{_iternorm_train.3} parent=39 // loop_footer_branch
                %195 = sbr.rel target = $region42
              $region47: #{_iternorm_train.3} parent=39 // loop_exit
                _
            $region40: #{_iternorm_train.3} parent=31 // pred_fallthru
              _
          $region32: #{_iternorm_train.3} parent=27 // pred_fallthru
            _
          %223 = vnop
        $region28: #{_iternorm_train.3} parent=23 // pred_fallthru
          _
      $region24: #{_iternorm_train.3} parent=5 // pred_fallthru
        _
      %p224 = scmp.le.s32.totalorder 1, %s9
      %p225 = scmp.lt.s32.totalorder %s9, 5
      %p226 = pnand %p224, %p225
      %p227 = pneg %p226
      // Predicated region
      $region63: #{_iternorm_train.3} parent=5 // pred_check
        _
      $region64: #{_iternorm_train.3} parent=5 // pred_check_branch
        %229 = sbr.rel (%p226) target = $region66
      $region65: #{_iternorm_train.3} parent=5 // pred_region
        %s230 = ssub.s32 %s9, 1
        %s231 = sand.u32 %s45, 1
        %s232 = sand.u32 %s45, 1
        %s233 = smul.addr %s232, 16
        %s234 = scalar_lea.vmem [#allocation2], %s233
        // Predicated region
        $region67: #{_iternorm_train.3} parent=65 // pred_check
          %p235 = pneg %p58
        $region68: #{_iternorm_train.3} parent=65 // pred_check_branch
          %237 = sbr.rel (%p235) target = $region70
        $region69: #{_iternorm_train.3} parent=65 // pred_region
          _
        $region70: #{_iternorm_train.3} parent=65 // pred_fallthru
          _
        %s238 = sand.u32 %s45, 1
        %s239 = sand.u32 %s45, 1
        %s240 = smul.addr %s239, 16
        %s241 = scalar_lea.vmem [#allocation2], %s240
        %p242 = pneg %p58
        %p243 = pneg %p55
        %p244 = scmp.lt.s32.totalorder %s19, 0
        %s245 = scalar_select %p244, %s19, 0
        %s246 = smul.addr %s245, 2
        %s247 = smul.addr %s246, 8
        %s248 = scalar_lea.vmem %s1, %s247
        %p249 = pneg %p84
        %p250 = pneg %p81
        %p251 = scmp.lt.s32.totalorder %s19, 0
        %s252 = scalar_select %p251, %s19, 0
        %s253 = smul.addr %s252, 2
        %s254 = smul.addr %s253, 8
        %s255 = scalar_lea.vmem %s2, %s254
        %p256 = pneg %p110
        %p257 = pneg %p107
        %p258 = pneg %p140
        %p259 = pneg %p137
        %s260 = sand.u32 %s127, 1
        %s261 = sand.u32 %s127, 1
        %s262 = smul.addr %s261, 16
        %s263 = scalar_lea.vmem [#allocation3], %s262
        %p264 = scmp.lt.s32.totalorder %s19, 0
        %s265 = scalar_select %p264, %s19, 0
        %s266 = smul.addr %s265, 2
        %s267 = smul.addr %s266, 8
        %s268 = scalar_lea.vmem %s1, %s267
        %p269 = scmp.lt.s32.totalorder %s19, 0
        %s270 = scalar_select %p269, %s19, 0
        %s271 = smul.addr %s270, 2
        %s272 = smul.addr %s271, 8
        %s273 = scalar_lea.vmem %s2, %s272
        %v274 = vld [vmem:[%s268] sm:$0xff]
        %v275 = vld [vmem:[%s268 + $0x8] sm:$0xff]
        %v276 = vld [vmem:[%s234] sm:$0xff]
        %v277 = vld [vmem:[%s234 + $0x8] sm:$0xff]
        %v278 = vld [vmem:[%s273] sm:$0xff]
        %v279 = vld [vmem:[%s273 + $0x8] sm:$0xff]
        %281 = vset.pattern.permute.xlu0 0
        %282 = vperm.xlu0 %281, %v278
        %v283 = vpop.permute.xlu0 %282
        %286 = vset.pattern.permute.xlu0 0
        %287 = vperm.xlu0 %286, %v279
        %v288 = vpop.permute.xlu0 %287
        %vm290 = vcmask 130048
        %v292 = vsel %vm290, %v274, 0
        %v295 = vsel %vm290, %v275, 0
        %297 = vmatprep.subr.mxu0 0.0
        %298 = vmatpush1.msra.mxu0 %v276
        %299 = vmatprep.subr.mxu0 0.0
        %300 = vmatpush1.msra.mxu0 %v277
        %301 = vmatprep.subr.mxu0 0.0
        %302 = vmatpush1.msra.mxu0 0.0
        %303 = vmatprep.subr.mxu0 0.0
        %304 = vmatpush1.msra.mxu0 0.0
        %305 = vmatprep.subr.mxu0 0.0
        %306 = vmatpush1.msra.mxu0 0.0
        %307 = vmatprep.subr.mxu0 0.0
        %308 = vmatpush1.msra.mxu0 0.0
        %309 = vmatprep.subr.mxu0 0.0
        %310 = vmatpush1.msra.mxu0 0.0
        %311 = vmatprep.subr.mxu0 0.0
        %312 = vmatpush1.msra.mxu0 0.0
        %313 = vmatprep.subr.mxu0 0.0
        %314 = vmatpush1.msra.mxu0 0.0
        %315 = vmatprep.subr.mxu0 0.0
        %316 = vmatpush1.msra.mxu0 0.0
        %317 = vmatprep.subr.mxu0 0.0
        %318 = vmatpush1.msra.mxu0 0.0
        %319 = vmatprep.subr.mxu0 0.0
        %320 = vmatpush1.msra.mxu0 0.0
        %321 = vmatprep.subr.mxu0 0.0
        %322 = vmatpush1.msra.mxu0 0.0
        %323 = vmatprep.subr.mxu0 0.0
        %324 = vmatpush1.msra.mxu0 0.0
        %325 = vmatprep.subr.mxu0 0.0
        %326 = vmatpush1.msra.mxu0 0.0
        %327 = vmatprep.subr.mxu0 0.0
        %328 = vmatpush1.msra.mxu0 0.0
        %329 = vmatprep.subr.mxu0 0.0
        %330 = vmatpush1.msra.mxu0 0.0
        %331 = vmatprep.subr.mxu0 0.0
        %332 = vmatpush1.msra.mxu0 0.0
        %333 = vmatprep.subr.mxu0 0.0
        %334 = vmatpush1.msra.mxu0 0.0
        %335 = vmatprep.subr.mxu0 0.0
        %336 = vmatpush1.msra.mxu0 0.0
        %337 = vmatprep.subr.mxu0 0.0
        %338 = vmatpush1.msra.mxu0 0.0
        %339 = vmatprep.subr.mxu0 0.0
        %340 = vmatpush1.msra.mxu0 0.0
        %341 = vmatprep.subr.mxu0 0.0
        %342 = vmatpush1.msra.mxu0 0.0
        %343 = vmatprep.subr.mxu0 0.0
        %344 = vmatpush1.msra.mxu0 0.0
        %345 = vmatprep.subr.mxu0 0.0
        %346 = vmatpush1.msra.mxu0 0.0
        %347 = vmatprep.subr.mxu0 0.0
        %348 = vmatpush1.msra.mxu0 0.0
        %349 = vmatprep.subr.mxu0 0.0
        %350 = vmatpush1.msra.mxu0 0.0
        %351 = vmatprep.subr.mxu0 0.0
        %352 = vmatpush1.msra.mxu0 0.0
        %353 = vmatprep.subr.mxu0 0.0
        %354 = vmatpush1.msra.mxu0 0.0
        %355 = vmatprep.subr.mxu0 0.0
        %356 = vmatpush1.msra.mxu0 0.0
        %357 = vmatprep.subr.mxu0 0.0
        %358 = vmatpush1.msra.mxu0 0.0
        %359 = vmatprep.subr.mxu0 0.0
        %360 = vmatpush1.msra.mxu0 0.0
        %361 = vmatprep.mubr.f32.mxu0 0.0
        %362 = vmatmul.mubr.f32.gmra.mrb[0].mxu0 %v292
        %v363 = vpop.f32.mrb[0].mxu0
        %v364 = vadd.f32 %v283, %v363
        %v365 = vpop.f32.mrb[0].mxu0
        %366 = vmatprep.mubr.f32.mxu0 0.0
        %367 = vmatmul.mubr.f32.gmra.mrb[0].mxu0 %v295
        %v368 = vpop.f32.mrb[0].mxu0
        %v369 = vadd.f32 %v288, %v368
        %v370 = vpop.f32.mrb[0].mxu0
        %371 = vdwg.mxu0
        %372 = vst [vmem:[%s263] sm:$0xff] %v364
        %373 = vst [vmem:[%s263 + $0x8] sm:$0xff] %v369
        %s374 = sand.u32 %s127, 1
        %s375 = sand.u32 %s127, 1
        %s376 = smul.addr %s375, 16
        %s377 = scalar_lea.vmem [#allocation3], %s376
        // Predicated region
        $region71: #{_iternorm_train.3} parent=65 // pred_check
          %p378 = pneg %p137
        $region72: #{_iternorm_train.3} parent=65 // pred_check_branch
          %380 = sbr.rel (%p378) target = $region74
        $region73: #{_iternorm_train.3} parent=65 // pred_region
          %s381 = smul.addr %s19, 4
          %s382 = sadd.s32 %s21, %s381
          %s383 = smul.addr %s20, 4
          %s384 = sadd.s32 %s382, %s383
          %s385 = smul.addr %s384, 8
          %s386 = scalar_lea.vmem %s3, %s385
          // Predicated region
          $region75: #{_iternorm_train.3} parent=73 // pred_check
            _
          $region76: #{_iternorm_train.3} parent=73 // pred_check_branch
            %388 = sbr.rel (0) target = $region78
          $region77: #{_iternorm_train.3} parent=73 // pred_region
            // Predicated region
            $region79: #{_iternorm_train.3} parent=77 // pred_check
              _
            $region80: #{_iternorm_train.3} parent=77 // pred_check_branch
              %390 = sbr.rel (0) target = $region82
            $region81: #{_iternorm_train.3} parent=77 // pred_region
              // Predicated region
              $region94: #{_iternorm_train.3} parent=81 // pred_check
                _
              $region95: #{_iternorm_train.3} parent=81 // pred_check_branch
                %407 = sbr.rel (0) target = $region97
              $region96: #{_iternorm_train.3} parent=81 // pred_region
                loop: start=0, step=1, limit=1
                $region98: #{_iternorm_train.3} parent=96 // loop_pre_header
                  _
                $region99: #{_iternorm_train.3} parent=96 // loop_header
                  %s409 = sphi 0, %s413
                  %p410 = scmp.ge.s32.totalorder %s409, 1
                  %s414 = sphi %s377, %s377
                  %s415 = sphi %s386, %s386
                $region100: #{_iternorm_train.3} parent=96 // loop_header_branch
                  %412 = sbr.rel (%p410) target = $region104
                $region101: #{_iternorm_train.3} parent=96 // loop_body
                  %v416 = vld [vmem:[%s414] sm:$0xff]
                  %417 = vst [vmem:[%s415] sm:$0xff] %v416
                  %v418 = vld [vmem:[%s414 + $0x8] sm:$0xff]
                  %419 = vst [vmem:[%s415 + $0x10] sm:$0xff] %v418
                $region102: #{_iternorm_train.3} parent=96 // loop_footer
                  %s413 = sadd.s32 1, %s409
                $region103: #{_iternorm_train.3} parent=96 // loop_footer_branch
                  %408 = sbr.rel target = $region99
                $region104: #{_iternorm_train.3} parent=96 // loop_exit
                  _
              $region97: #{_iternorm_train.3} parent=81 // pred_fallthru
                _
              // Predicated region
              $region105: #{_iternorm_train.3} parent=81 // pred_check
                _
              $region106: #{_iternorm_train.3} parent=81 // pred_check_branch
                %421 = sbr.rel target = $region108
              $region107: #{_iternorm_train.3} parent=81 // pred_region
                _
              $region108: #{_iternorm_train.3} parent=81 // pred_fallthru
                _
            $region82: #{_iternorm_train.3} parent=77 // pred_fallthru
              _
            // Predicated region
            $region83: #{_iternorm_train.3} parent=77 // pred_check
              _
            $region84: #{_iternorm_train.3} parent=77 // pred_check_branch
              %392 = sbr.rel target = $region86
            $region85: #{_iternorm_train.3} parent=77 // pred_region
              loop: start=0, step=1, limit=1
              $region87: #{_iternorm_train.3} parent=85 // loop_pre_header
                _
              $region88: #{_iternorm_train.3} parent=85 // loop_header
                %s395 = sphi 0, %s399
                %p396 = scmp.ge.s32.totalorder %s395, 1
                %s400 = sphi %s377, %s377
                %s401 = sphi %s386, %s386
              $region89: #{_iternorm_train.3} parent=85 // loop_header_branch
                %398 = sbr.rel (%p396) target = $region93
              $region90: #{_iternorm_train.3} parent=85 // loop_body
                %v402 = vld [vmem:[%s400] sm:$0xff]
                %403 = vst [vmem:[%s401] sm:$0xff] %v402
                %v404 = vld [vmem:[%s400 + $0x8] sm:$0xff]
                %405 = vst [vmem:[%s401 + $0x10] sm:$0xff] %v404
              $region91: #{_iternorm_train.3} parent=85 // loop_footer
                %s399 = sadd.s32 1, %s395
              $region92: #{_iternorm_train.3} parent=85 // loop_footer_branch
                %394 = sbr.rel target = $region88
              $region93: #{_iternorm_train.3} parent=85 // loop_exit
                _
            $region86: #{_iternorm_train.3} parent=77 // pred_fallthru
              _
          $region78: #{_iternorm_train.3} parent=73 // pred_fallthru
            _
          %422 = vnop
        $region74: #{_iternorm_train.3} parent=65 // pred_fallthru
          _
      $region66: #{_iternorm_train.3} parent=5 // pred_fallthru
        _
      %p423 = scmp.le.s32.totalorder 2, %s9
      // Predicated region
      $region109: #{_iternorm_train.3} parent=5 // pred_check
        %p424 = pneg %p423
      $region110: #{_iternorm_train.3} parent=5 // pred_check_branch
        %426 = sbr.rel (%p424) target = $region112
      $region111: #{_iternorm_train.3} parent=5 // pred_region
        %s427 = ssub.s32 %s9, 2
        // Predicated region
        $region113: #{_iternorm_train.3} parent=111 // pred_check
          %p428 = pneg %p143
        $region114: #{_iternorm_train.3} parent=111 // pred_check_branch
          %430 = sbr.rel (%p428) target = $region116
        $region115: #{_iternorm_train.3} parent=111 // pred_region
          %s431 = sand.u32 %s128, 1
          %s432 = sand.u32 %s128, 1
          %s433 = smul.addr %s432, 16
          %s434 = scalar_lea.vmem [#allocation3], %s433
        $region116: #{_iternorm_train.3} parent=111 // pred_fallthru
          _
      $region112: #{_iternorm_train.3} parent=5 // pred_fallthru
        _
    $region6: #{_iternorm_train.3} parent=1 // loop_footer
      %s13 = sadd.s32 1, %s9
    $region7: #{_iternorm_train.3} parent=1 // loop_footer_branch
      %8 = sbr.rel target = $region3
    $region8: #{_iternorm_train.3} parent=1 // loop_exit
      _

</llo_original>
